<compile_context>
chip_gen: v6e
topology: v6e:2x2x1
jax: 0.10.0
libtpu: 0.0.40
codegen_flags: <defaults>
</compile_context>

<pallas_src>
import functools

import jax
import jax.numpy as jnp
from jax import lax
from jax.experimental import pallas as pl
from jax.experimental.pallas import tpu as pltpu


def _neg_ranking_loss_kernel(e1_ref, e2_ref, out_ref, *, row_block, use_bf16):
    i = pl.program_id(0)

    e1 = e1_ref[...].astype(jnp.float32)   # (tm, D) row tile of lhs embeddings
    e2 = e2_ref[...].astype(jnp.float32)   # (N, D)  full rhs embeddings (resident)

    # Row-wise L2 normalize (PyTorch F.normalize, eps=1e-12 on the norm).
    # Temperature 16 folded into the lhs scale (power of two -> exact in bf16 too).
    inv1 = 16.0 * lax.rsqrt(
        jnp.maximum(jnp.sum(e1 * e1, axis=1, keepdims=True), 1e-24))
    inv2 = lax.rsqrt(
        jnp.maximum(jnp.sum(e2 * e2, axis=1, keepdims=True), 1e-24))
    n1 = e1 * inv1                           # (tm, D), includes the *16 temperature
    n2 = e2 * inv2                           # (N, D)

    # Scaled similarity logits for this row tile: contract over D directly on the
    # MXU (no transpose materialized).
    if use_bf16:
        lhs, rhs = n1.astype(jnp.bfloat16), n2.astype(jnp.bfloat16)
    else:
        lhs, rhs = n1, n2
    s = lax.dot_general(lhs, rhs,
                        dimension_numbers=(((1,), (1,)), ((), ())),
                        preferred_element_type=jnp.float32)      # (tm, N)

    # Diagonal logits (labels = arange): pair each lhs row with its matching rhs
    # row, computed in f32 as an O(tm*D) elementwise dot (no iota/where masks).
    start = pl.multiple_of(i * row_block, row_block)
    e2d = e2_ref[pl.ds(start, row_block), :].astype(jnp.float32)  # (tm, D)
    inv2d = lax.rsqrt(
        jnp.maximum(jnp.sum(e2d * e2d, axis=1, keepdims=True), 1e-24))
    diag = jnp.sum(n1 * (e2d * inv2d), axis=1, keepdims=True)     # (tm, 1)

    # Row-wise log-sum-exp; keep everything (tm, 1) to stay in sublane layout.
    m = jnp.max(s, axis=1, keepdims=True)
    lse = m + jnp.log(jnp.sum(jnp.exp(s - m), axis=1, keepdims=True))

    out_ref[...] = lse - diag                # per-row cross-entropy loss


def _pick_row_block(n: int) -> int:
    for t in (512, 256, 128):
        if n % t == 0:
            return t
    return n


def negatives_ranking_loss(e1: jax.Array, e2: jax.Array, *,
                           row_block: int | None = None,
                           use_bf16_matmul: bool = True) -> jax.Array:
    """e1, e2: (N, D) embeddings -> scalar f32 loss."""
    assert e1.shape == e2.shape and e1.ndim == 2
    n, d = e1.shape
    tm = _pick_row_block(n) if row_block is None else row_block
    assert n % tm == 0 and tm >= 1

    kernel = functools.partial(_neg_ranking_loss_kernel,
                               row_block=tm, use_bf16=use_bf16_matmul)

    itemsize = jnp.dtype(e1.dtype).itemsize
    # e1 tile + e2 (double-buffered) + out tile + similarity-sized intermediates.
    vmem_est = (2 * tm * d * itemsize + 2 * n * d * itemsize + 2 * tm * 4
                + 4 * tm * n * 4 + (2 << 20))
    vmem_limit = int(min(max(vmem_est, 32 * 1024 * 1024), 64 * 1024 * 1024))

    per_row_loss = pl.pallas_call(
        kernel,
        out_shape=jax.ShapeDtypeStruct((n, 1), jnp.float32),
        grid_spec=pltpu.PrefetchScalarGridSpec(
            num_scalar_prefetch=0,
            grid=(n // tm,),
            in_specs=[
                pl.BlockSpec((tm, d), lambda i: (i, 0)),   # lhs row tile
                pl.BlockSpec((n, d), lambda i: (0, 0)),    # full rhs, resident
            ],
            out_specs=pl.BlockSpec((tm, 1), lambda i: (i, 0)),
        ),
        compiler_params=pltpu.CompilerParams(
            dimension_semantics=("parallel",),
            vmem_limit_bytes=vmem_limit,
        ),
        cost_estimate=pl.CostEstimate(
            flops=int(2 * n * n * d + 8 * n * d + 4 * n * n),
            transcendentals=int(n * n + 3 * n),
            bytes_accessed=int((n // tm) * n * d * itemsize + n * d * itemsize + n * 4),
        ),
    )(e1, e2)

    return jnp.mean(per_row_loss)


# ----------------------------- references ----------------------------------

def _reference_loss_f32(e1, e2):
    n1 = e1 / jnp.maximum(jnp.linalg.norm(e1, axis=1, keepdims=True), 1e-12)
    n2 = e2 / jnp.maximum(jnp.linalg.norm(e2, axis=1, keepdims=True), 1e-12)
    s = (n1 @ n2.T) * 16.0
    logp = jax.nn.log_softmax(s, axis=1)
    idx = jnp.arange(s.shape[0])
    return -jnp.mean(logp[idx, idx])


def _reference_loss_bf16_matmul(e1, e2):
    # Mirrors the kernel's precision choices: f32 normalize / diag / softmax,
    # bf16 MXU operands with f32 accumulation for the (N, N) logits.
    inv1 = 16.0 * lax.rsqrt(jnp.maximum(jnp.sum(e1 * e1, 1, keepdims=True), 1e-24))
    inv2 = lax.rsqrt(jnp.maximum(jnp.sum(e2 * e2, 1, keepdims=True), 1e-24))
    n1 = e1 * inv1
    n2 = e2 * inv2
    s = lax.dot_general(n1.astype(jnp.bfloat16), n2.astype(jnp.bfloat16),
                        dimension_numbers=(((1,), (1,)), ((), ())),
                        preferred_element_type=jnp.float32)
    diag = jnp.sum(n1 * n2, axis=1, keepdims=True)
    m = jnp.max(s, axis=1, keepdims=True)
    lse = m + jnp.log(jnp.sum(jnp.exp(s - m), axis=1, keepdims=True))
    return jnp.mean(lse - diag)


if __name__ == "__main__":
    key = jax.random.PRNGKey(0)
    k1, k2, k3, k4 = jax.random.split(key, 4)

    # Small batch of sentence-embedding pairs (batch=8, hidden=32).
    N, D = 8, 32
    e1 = jax.random.normal(k1, (N, D), dtype=jnp.float32)
    e2 = jax.random.normal(k2, (N, D), dtype=jnp.float32)

    # 1) f32-operand path vs pure-f32 reference (tight tolerance).
    loss_f32 = jax.block_until_ready(
        negatives_ranking_loss(e1, e2, use_bf16_matmul=False))
    ref_f32 = _reference_loss_f32(e1, e2)
    assert jnp.allclose(loss_f32, ref_f32, atol=1e-4, rtol=1e-4), (loss_f32, ref_f32)

    # 2) bf16-operand (MXU-fast, default) path vs precision-matched reference,
    #    plus a loose sanity check against the f32 reference.
    loss_bf16 = jax.block_until_ready(negatives_ranking_loss(e1, e2))
    ref_bf16 = _reference_loss_bf16_matmul(e1, e2)
    assert jnp.allclose(loss_bf16, ref_bf16, atol=1e-4, rtol=1e-4), (loss_bf16, ref_bf16)
    assert jnp.allclose(loss_bf16, ref_f32, atol=5e-2, rtol=5e-2), (loss_bf16, ref_f32)

    # 3) Multi-block row-tiled path (exercises the parallel grid + diag slicing).
    N2, D2 = 32, 32
    e3 = jax.random.normal(k3, (N2, D2), dtype=jnp.float32)
    e4 = jax.random.normal(k4, (N2, D2), dtype=jnp.float32)
    loss_tiled = jax.block_until_ready(
        negatives_ranking_loss(e3, e4, row_block=8, use_bf16_matmul=False))
    ref_tiled = _reference_loss_f32(e3, e4)
    assert jnp.allclose(loss_tiled, ref_tiled, atol=1e-4, rtol=1e-4), (loss_tiled, ref_tiled)

    print("KERNEL_OK")
</pallas_src>

<mosaic_0001>
module attributes {stable_mosaic.version = 11 : i64} {
  func.func @_neg_ranking_loss_kernel(%arg0: i32, %arg1: memref<8x32xf32, #tpu.memory_space<vmem>>, %arg2: memref<8x32xf32, #tpu.memory_space<vmem>>, %arg3: memref<8x1xf32, #tpu.memory_space<vmem>>) attributes {dimension_semantics = [#tpu.dimension_semantics<parallel>], iteration_bounds = array<i64: 1>, scalar_prefetch = 0 : i64, scratch_operands = 0 : i64, tpu.core_type = #tpu.core_type<tc>, window_params = [{transform_indices = @transform_0, window_bounds = array<i64: 8, 32>}, {pipeline_mode = #tpu.pipeline_mode<synchronous>, transform_indices = @transform_1, window_bounds = array<i64: 8, 32>}, {transform_indices = @transform_2, window_bounds = array<i64: 8, 1>}]} {
    %c0 = arith.constant 0 : index
    %c0_0 = arith.constant 0 : index
    %0 = vector.load %arg1[%c0, %c0_0] : memref<8x32xf32, #tpu.memory_space<vmem>>, vector<8x32xf32>
    %c0_1 = arith.constant 0 : index
    %c0_2 = arith.constant 0 : index
    %1 = vector.load %arg2[%c0_1, %c0_2] : memref<8x32xf32, #tpu.memory_space<vmem>>, vector<8x32xf32>
    %2 = arith.mulf %0, %0 : vector<8x32xf32>
    %cst = arith.constant dense<0.000000e+00> : vector<8xf32>
    %3 = vector.multi_reduction <add>, %2, %cst [1] : vector<8x32xf32> to vector<8xf32>
    %4 = vector.shape_cast %3 : vector<8xf32> to vector<8x1xf32>
    %cst_3 = arith.constant 1.000000e-24 : f32
    %5 = vector.broadcast %cst_3 : f32 to vector<8x1xf32>
    %6 = arith.maximumf %4, %5 : vector<8x1xf32>
    %7 = math.rsqrt %6 : vector<8x1xf32>
    %cst_4 = arith.constant 1.600000e+01 : f32
    %8 = vector.broadcast %cst_4 : f32 to vector<8x1xf32>
    %9 = arith.mulf %8, %7 : vector<8x1xf32>
    %10 = arith.mulf %1, %1 : vector<8x32xf32>
    %cst_5 = arith.constant dense<0.000000e+00> : vector<8xf32>
    %11 = vector.multi_reduction <add>, %10, %cst_5 [1] : vector<8x32xf32> to vector<8xf32>
    %12 = vector.shape_cast %11 : vector<8xf32> to vector<8x1xf32>
    %cst_6 = arith.constant 1.000000e-24 : f32
    %13 = vector.broadcast %cst_6 : f32 to vector<8x1xf32>
    %14 = arith.maximumf %12, %13 : vector<8x1xf32>
    %15 = math.rsqrt %14 : vector<8x1xf32>
    %16 = vector.broadcast %9 : vector<8x1xf32> to vector<8x32xf32>
    %17 = arith.mulf %0, %16 : vector<8x32xf32>
    %18 = vector.broadcast %15 : vector<8x1xf32> to vector<8x32xf32>
    %19 = arith.mulf %1, %18 : vector<8x32xf32>
    %cst_7 = arith.constant dense<0.000000e+00> : vector<8x8xf32>
    %20 = tpu.matmul %17, %19, %cst_7 {dimension_numbers = #tpu.dot_dimension_numbers<[1], [1], [0], [0], [0, 0, 1, 0], [], []>} : vector<8x32xf32>, vector<8x32xf32>, vector<8x8xf32> -> vector<8x8xf32>
    %c8_i32 = arith.constant 8 : i32
    %21 = arith.muli %arg0, %c8_i32 : i32
    %22 = tpu.assume_multiple %21, 8 : i32
    %23 = arith.index_cast %22 : i32 to index
    %c0_8 = arith.constant 0 : index
    %24 = vector.load %arg2[%23, %c0_8] : memref<8x32xf32, #tpu.memory_space<vmem>>, vector<8x32xf32>
    %25 = arith.mulf %24, %24 : vector<8x32xf32>
    %cst_9 = arith.constant dense<0.000000e+00> : vector<8xf32>
    %26 = vector.multi_reduction <add>, %25, %cst_9 [1] : vector<8x32xf32> to vector<8xf32>
    %27 = vector.shape_cast %26 : vector<8xf32> to vector<8x1xf32>
    %cst_10 = arith.constant 1.000000e-24 : f32
    %28 = vector.broadcast %cst_10 : f32 to vector<8x1xf32>
    %29 = arith.maximumf %27, %28 : vector<8x1xf32>
    %30 = math.rsqrt %29 : vector<8x1xf32>
    %31 = vector.broadcast %30 : vector<8x1xf32> to vector<8x32xf32>
    %32 = arith.mulf %24, %31 : vector<8x32xf32>
    %33 = arith.mulf %17, %32 : vector<8x32xf32>
    %cst_11 = arith.constant dense<0.000000e+00> : vector<8xf32>
    %34 = vector.multi_reduction <add>, %33, %cst_11 [1] : vector<8x32xf32> to vector<8xf32>
    %35 = vector.shape_cast %34 : vector<8xf32> to vector<8x1xf32>
    %cst_12 = arith.constant dense<0xFF800000> : vector<8xf32>
    %36 = vector.multi_reduction <maximumf>, %20, %cst_12 [1] : vector<8x8xf32> to vector<8xf32>
    %37 = vector.shape_cast %36 : vector<8xf32> to vector<8x1xf32>
    %38 = vector.broadcast %37 : vector<8x1xf32> to vector<8x8xf32>
    %39 = arith.subf %20, %38 : vector<8x8xf32>
    %40 = math.exp %39 : vector<8x8xf32>
    %cst_13 = arith.constant dense<0.000000e+00> : vector<8xf32>
    %41 = vector.multi_reduction <add>, %40, %cst_13 [1] : vector<8x8xf32> to vector<8xf32>
    %42 = vector.shape_cast %41 : vector<8xf32> to vector<8x1xf32>
    %43 = math.log %42 : vector<8x1xf32>
    %44 = arith.addf %37, %43 : vector<8x1xf32>
    %45 = arith.subf %44, %35 : vector<8x1xf32>
    %c0_14 = arith.constant 0 : index
    %c0_15 = arith.constant 0 : index
    %46 = vector.load %arg3[%c0_14, %c0_15] : memref<8x1xf32, #tpu.memory_space<vmem>>, vector<8x1xf32>
    tpu.vector_store %arg3[%c0_14, %c0_15], %45 {strides = array<i32>} : memref<8x1xf32, #tpu.memory_space<vmem>>, vector<8x1xf32>,
    return
  }
  func.func @transform_0(%arg0: i32) -> (i32, i32) {
    %c0_i32 = arith.constant 0 : i32
    %c0_i32_0 = arith.constant 0 : i32
    return %arg0, %c0_i32 : i32, i32
  }
  func.func @transform_1(%arg0: i32) -> (i32, i32) {
    %c0_i32 = arith.constant 0 : i32
    %c0_i32_0 = arith.constant 0 : i32
    %c0_i32_1 = arith.constant 0 : i32
    return %c0_i32, %c0_i32_0 : i32, i32
  }
  func.func @transform_2(%arg0: i32) -> (i32, i32) {
    %c0_i32 = arith.constant 0 : i32
    %c0_i32_0 = arith.constant 0 : i32
    return %arg0, %c0_i32 : i32, i32
  }
}

</mosaic_0001>

<llo_original>
// kernel: tpu_custom_call.1
$region0: #{tpu_custom_call.1}
  #allocation0 [shape = 'u32[]', space=smem, size = 0x4, offset = 0x4, fixed_abs, tag = 'smem constant byte address 0x4 - core index']
  #allocation1 [shape = 'u32[144,128]{1,0:T(1,128)}', space=vmem, size = 0x12000, scoped, tag = 'internal scratch']
  %s0 = inlined_call_operand.hbm [shape: f32[8,32], index: 0, kind: input, shape index: {}]
  %s1 = inlined_call_operand.hbm [shape: f32[8,32], index: 1, kind: input, shape index: {}]
  %s2 = inlined_call_operand.vmem [shape: f32[8,1], index: 2, kind: output, shape index: {}]
  %s3 = sld [smem:[#allocation0]]
  $region26: #{tpu_custom_call.1} parent=0
    _
  %s5 = ssub.s32 1, %s3
  %s6 = scalar_select 0, %s5, %s3
  $region1: #{tpu_custom_call.1} parent=0
    #allocation2 [shape = 'u8[4096]{0}', space=vmem, size = 0x1000, scoped, tag = 'input window, operand 0, single buffered']
    #allocation3 [shape = 's32[1]{0}', space=sflag, size = 0x4, scoped, tag = 'scoped memory for tpu_custom_call.1']
    #allocation4 [shape = 'u8[4096]{0}', space=vmem, size = 0x1000, scoped, tag = 'input window, operand 1, single buffered']
    #allocation5 [shape = 's32[1]{0}', space=sflag, size = 0x4, scoped, tag = 'scoped memory for tpu_custom_call.1']
    %7 = vsyncpa [#allocation3], 0
    %8 = vsyncpa [#allocation5], 0
    // Predicated region
    $region2: #{tpu_custom_call.1} parent=1 // pred_check
      _
    $region3: #{tpu_custom_call.1} parent=1 // pred_check_branch
      %10 = sbr.rel (0) target = $region5
    $region4: #{tpu_custom_call.1} parent=1 // pred_region
      %s12 = ssub.s32 128, 128
      %13 = vsyncadd [#allocation3], %s12
      %s15 = sshll.u32 [#allocation2], 4
      %s16 = int_to_ptr.vmem [resolvable:$true] %s15
      %18 = dma.hbm_to_vmem [thread:$0]  %s0, 128, %s16, [#allocation3]
    $region5: #{tpu_custom_call.1} parent=1 // pred_fallthru
      _
    // Predicated region
    $region6: #{tpu_custom_call.1} parent=1 // pred_check
      _
    $region7: #{tpu_custom_call.1} parent=1 // pred_check_branch
      %20 = sbr.rel (0) target = $region9
    $region8: #{tpu_custom_call.1} parent=1 // pred_region
      %s22 = ssub.s32 128, 128
      %23 = vsyncadd [#allocation5], %s22
      %s25 = sshll.u32 [#allocation4], 4
      %s26 = int_to_ptr.vmem [resolvable:$true] %s25
      %28 = dma.hbm_to_vmem [thread:$0]  %s1, 128, %s26, [#allocation5]
    $region9: #{tpu_custom_call.1} parent=1 // pred_fallthru
      _
    // Predicated region
    $region10: #{tpu_custom_call.1} parent=1 // pred_check
      _
    $region11: #{tpu_custom_call.1} parent=1 // pred_check_branch
      %30 = sbr.rel (0) target = $region13
    $region12: #{tpu_custom_call.1} parent=1 // pred_region
      %31 = dma.done [#allocation3], 128
    $region13: #{tpu_custom_call.1} parent=1 // pred_fallthru
      _
    // Predicated region
    $region14: #{tpu_custom_call.1} parent=1 // pred_check
      _
    $region15: #{tpu_custom_call.1} parent=1 // pred_check_branch
      %33 = sbr.rel (0) target = $region17
    $region16: #{tpu_custom_call.1} parent=1 // pred_region
      %34 = dma.done [#allocation5], 128
    $region17: #{tpu_custom_call.1} parent=1 // pred_fallthru
      _
    %v35 = vld [vmem:[#allocation2] sm:$0xff]
    %v36 = vld [vmem:[#allocation4] sm:$0xff]
    %v37 = vmul.f32 %v35, %v35
    %vm38 = vcmask 261120
    %v39 = vsel %vm38, %v37, 0.0
    %40 = vadd.xlane.f32.xlu0 %v39
    %v41 = vpop.xlane.xlu0 %40
    %v42 = vmax.f32 %v41, 1e-24
    %v43 = vrsqrt.pop %v42
    %v44 = vmul.f32 %v43, 16.0
    %v45 = vmul.f32 %v36, %v36
    %v46 = vsel %vm38, %v45, 0.0
    %47 = vadd.xlane.f32.xlu0 %v46
    %v48 = vpop.xlane.xlu0 %47
    %v49 = vmax.f32 %v48, 1e-24
    %v50 = vrsqrt.pop %v49
    %v51 = vmul.f32 %v35, %v44
    %v52 = vmul.f32 %v36, %v50
    %v54 = vsel %vm38, %v51, 0
    %v57 = vsel %vm38, %v52, 0
    %59 = vmatprep.subr.mxu0 0.0
    %60 = vmatpush1.xpose.msra.mxu0 0.0
    %61 = vmatprep.subr.mxu0 0.0
    %62 = vmatpush1.xpose.msra.mxu0 0.0
    %63 = vmatprep.subr.mxu0 0.0
    %64 = vmatpush1.xpose.msra.mxu0 0.0
    %65 = vmatprep.subr.mxu0 0.0
    %66 = vmatpush1.xpose.msra.mxu0 0.0
    %67 = vmatprep.subr.mxu0 0.0
    %68 = vmatpush1.xpose.msra.mxu0 0.0
    %69 = vmatprep.subr.mxu0 0.0
    %70 = vmatpush1.xpose.msra.mxu0 0.0
    %71 = vmatprep.subr.mxu0 0.0
    %72 = vmatpush1.xpose.msra.mxu0 0.0
    %73 = vmatprep.subr.mxu0 0.0
    %74 = vmatpush1.xpose.msra.mxu0 0.0
    %75 = vmatprep.subr.mxu0 0.0
    %76 = vmatpush1.xpose.msra.mxu0 0.0
    %77 = vmatprep.subr.mxu0 0.0
    %78 = vmatpush1.xpose.msra.mxu0 0.0
    %79 = vmatprep.subr.mxu0 0.0
    %80 = vmatpush1.xpose.msra.mxu0 0.0
    %81 = vmatprep.subr.mxu0 0.0
    %82 = vmatpush1.xpose.msra.mxu0 0.0
    %83 = vmatprep.subr.mxu0 0.0
    %84 = vmatpush1.xpose.msra.mxu0 0.0
    %85 = vmatprep.subr.mxu0 0.0
    %86 = vmatpush1.xpose.msra.mxu0 0.0
    %87 = vmatprep.subr.mxu0 0.0
    %88 = vmatpush1.xpose.msra.mxu0 0.0
    %89 = vmatprep.subr.mxu0 0.0
    %90 = vmatpush1.xpose.msra.mxu0 %v57
    %91 = vmatprep.subr.mxu0 0.0
    %92 = vmatpush2.xpose.msra.mxu0 0.0
    %93 = vmatprep.subr.mxu0 0.0
    %94 = vmatpush2.xpose.msra.mxu0 0.0
    %95 = vmatprep.subr.mxu0 0.0
    %96 = vmatpush2.xpose.msra.mxu0 0.0
    %97 = vmatprep.subr.mxu0 0.0
    %98 = vmatpush2.xpose.msra.mxu0 0.0
    %99 = vmatprep.subr.mxu0 0.0
    %100 = vmatpush2.xpose.msra.mxu0 0.0
    %101 = vmatprep.subr.mxu0 0.0
    %102 = vmatpush2.xpose.msra.mxu0 0.0
    %103 = vmatprep.subr.mxu0 0.0
    %104 = vmatpush2.xpose.msra.mxu0 0.0
    %105 = vmatprep.subr.mxu0 0.0
    %106 = vmatpush2.xpose.msra.mxu0 0.0
    %107 = vmatprep.subr.mxu0 0.0
    %108 = vmatpush2.xpose.msra.mxu0 0.0
    %109 = vmatprep.subr.mxu0 0.0
    %110 = vmatpush2.xpose.msra.mxu0 0.0
    %111 = vmatprep.subr.mxu0 0.0
    %112 = vmatpush2.xpose.msra.mxu0 0.0
    %113 = vmatprep.subr.mxu0 0.0
    %114 = vmatpush2.xpose.msra.mxu0 0.0
    %115 = vmatprep.subr.mxu0 0.0
    %116 = vmatpush2.xpose.msra.mxu0 0.0
    %117 = vmatprep.subr.mxu0 0.0
    %118 = vmatpush2.xpose.msra.mxu0 0.0
    %119 = vmatprep.subr.mxu0 0.0
    %120 = vmatpush2.xpose.msra.mxu0 0.0
    %121 = vmatprep.subr.mxu0 0.0
    %122 = vmatpush2.xpose.msra.mxu0 0.0
    %123 = vmatprep.mubr.f32.mxu0 0.0
    %124 = vmatmul.mubr.f32.gmra.mxu0 %v54
    %v125 = vpop.f32.mrf.mxu0
    %v126 = vadd.f32 0.0, %v125
    %v127 = vpop.f32.mrf.mxu0
    %128 = vdwg.mxu0
    %s129 = smul.u32 0, 8
    %s130 = scalar_lea.vmem [#allocation4], %s129
    %v131 = vld [vmem:[%s130] sm:$0xff]
    %v132 = vmul.f32 %v131, %v131
    %v133 = vsel %vm38, %v132, 0.0
    %134 = vadd.xlane.f32.xlu0 %v133
    %v135 = vpop.xlane.xlu0 %134
    %v136 = vmax.f32 %v135, 1e-24
    %v137 = vrsqrt.pop %v136
    %v138 = vmul.f32 %v131, %v137
    %v139 = vmul.f32 %v51, %v138
    %v140 = vsel %vm38, %v139, 0.0
    %141 = vadd.xlane.f32.xlu0 %v140
    %v142 = vpop.xlane.xlu0 %141
    %vm143 = vcmask 64512
    %v144 = vsel %vm143, %v126, -inf
    %145 = vmax.xlane.f32.xlu0 %v144
    %v146 = vpop.xlane.xlu0 %145
    %v147 = vsub.f32 %v126, %v146
    %v148 = vmul.f32 %v147, 1.442695
    %v149 = vpow.pop %v148
    %v150 = vsel %vm143, %v149, 0.0
    %151 = vadd.xlane.f32.xlu0 %v150
    %v152 = vpop.xlane.xlu0 %151
    %v153 = vlog2.pop %v152
    %v154 = vmul.f32 %v153, 0.6931472
    %v155 = vadd.f32 %v146, %v154
    %v156 = vsub.f32 %v155, %v142
    %vm157 = vcmask 7168
    %158 = vst.msk [vmem:[%s2] sm:$0xff] %vm157, %v156
    // Predicated region
    $region18: #{tpu_custom_call.1} parent=1 // pred_check
      _
    $region19: #{tpu_custom_call.1} parent=1 // pred_check_branch
      %160 = sbr.rel (0) target = $region21
    $region20: #{tpu_custom_call.1} parent=1 // pred_region
      _
    $region21: #{tpu_custom_call.1} parent=1 // pred_fallthru
      _
    // Predicated region
    $region22: #{tpu_custom_call.1} parent=1 // pred_check
      _
    $region23: #{tpu_custom_call.1} parent=1 // pred_check_branch
      %162 = sbr.rel (0) target = $region25
    $region24: #{tpu_custom_call.1} parent=1 // pred_region
      _
    $region25: #{tpu_custom_call.1} parent=1 // pred_fallthru
      _
    %163 = vsyncpa [#allocation3], 1
    %164 = vsyncpa [#allocation5], 1

</llo_original>
